<compile_context>
chip_gen: v7x
topology: tpu7x:2x2x1
jax: 0.10.0
libtpu: 0.0.40
codegen_flags: <defaults>
</compile_context>

<pallas_src>
import numpy as np
import jax
import jax.numpy as jnp
from jax.experimental import pallas as pl
from jax.experimental.pallas import tpu as pltpu

KERNEL_SIZE = 5
MASK_SIZE = 3


def _ring_taps(k=KERNEL_SIZE, m=MASK_SIZE):
    lo = (k - m) // 2
    hi = (k + m) // 2
    return tuple((dy, dx) for dy in range(k) for dx in range(k)
                 if not (lo <= dy < hi and lo <= dx < hi))


RING_TAPS = _ring_taps()          # 16 live taps for kernel_size=5, mask_size=3


def _pick_btile(b, max_tile=8):
    """Largest divisor of b (<= max_tile) that still leaves >= 2 grid steps."""
    if b < 2:
        return max(b, 1)
    best = 1
    for t in range(1, min(b, max_tile) + 1):
        if b % t == 0 and (b // t) >= 2:
            best = t
    return best


# --------------------------------------------------------------------------
# Pallas kernel: fused ring-im2col (sublane-stacked flat-shift slabs) +
# one (cout, K) @ (K, hw) matmul + bias, BTILE images per grid step.
# --------------------------------------------------------------------------
def _make_kernel(btile, shifts, lout):
    def kernel(xpf_ref, w_ref, b_ref, o_ref):
        # xpf_ref: (btile, cin, FLAT)  bf16 padded image, spatial flattened
        # w_ref  : (cout, T*cin)       bf16 pre-transposed ring weight
        # b_ref  : (cout, 1)           f32  bias (column)
        # o_ref  : (btile, cout, lout) f32  output, lane-dense (lout = h*Wp)
        wmat = w_ref[...]
        bias = b_ref[...]
        for n in range(btile):                       # static unroll, btile small
            xpf = xpf_ref[n]                         # (cin, FLAT)
            # Flat-shift ring im2col: each slab is a full-width lane-shifted
            # window; stacking happens along the sublane (leading) axis only.
            patches = jnp.concatenate(
                [xpf[:, s:s + lout] for s in shifts], axis=0)   # (T*cin, lout)
            o_ref[n] = jnp.dot(wmat, patches,
                               preferred_element_type=jnp.float32) + bias
    return kernel


@jax.jit
def masked_conv2d_pallas(x_nchw, w_ring_t_bf16, bias_col):
    """Masked 'same' conv.  x_nchw (B, Cin, H, W) f32 -> (B, Cout, H, W) f32."""
    b, cin, h, w = x_nchw.shape
    cout, kdim = w_ring_t_bf16.shape
    p = (KERNEL_SIZE - 1) // 2
    wp = w + 2 * p                                   # padded width
    lout = h * wp                                    # flat output length / image
    max_shift = (KERNEL_SIZE - 1) * wp + (KERNEL_SIZE - 1)
    rows_needed = -(-(max_shift + lout) // wp)       # ceil
    extra = max(0, rows_needed - (h + 2 * p))        # bottom slack rows (zeros)
    flat = (h + 2 * p + extra) * wp

    # Layout glue (tiny, fused by XLA): zero 'same' pad + bf16 cast + flatten
    # spatial so the kernel sees a lane-dense (cin, flat) slab per image.
    # TODO(synk): at large H/W move the pad into the kernel (zeroed VMEM
    # scratch + interior-row DMA) and halo-tile rows, sized for v7x's 64 MiB VMEM.
    xpf = jnp.pad(x_nchw.astype(jnp.bfloat16),
                  ((0, 0), (0, 0), (p, p + extra), (p, p))).reshape(b, cin, flat)

    btile = _pick_btile(b)
    shifts = tuple(dy * wp + dx for (dy, dx) in RING_TAPS)

    out = pl.pallas_call(
        _make_kernel(btile, shifts, lout),
        out_shape=jax.ShapeDtypeStruct((b, cout, lout), jnp.float32),
        grid=(b // btile,),
        in_specs=[
            pl.BlockSpec((btile, cin, flat), lambda i: (i, 0, 0)),   # activations
            pl.BlockSpec((cout, kdim), lambda i: (0, 0)),            # ring weight
            pl.BlockSpec((cout, 1), lambda i: (0, 0)),               # bias
        ],
        out_specs=pl.BlockSpec((btile, cout, lout), lambda i: (i, 0, 0)),
        compiler_params=pltpu.CompilerParams(
            dimension_semantics=("parallel",)),      # batch split across TCs
    )(xpf, w_ring_t_bf16, bias_col)

    # Drop the (wp - w) garbage columns introduced by the flat-shift trick.
    return out.reshape(b, cout, h, wp)[:, :, :, :w]


# --------------------------------------------------------------------------
# Deterministic parameters + pure-JAX reference (same math, HIGHEST precision).
# --------------------------------------------------------------------------
def make_params(key, cin, cout):
    k1, k2 = jax.random.split(key)
    fan_in = cin * KERNEL_SIZE * KERNEL_SIZE
    w_full = jax.random.normal(
        k1, (cout, cin, KERNEL_SIZE, KERNEL_SIZE), jnp.float32) / np.sqrt(fan_in)
    bias = 0.05 * jax.random.normal(k2, (cout,), jnp.float32)

    mask = np.ones((KERNEL_SIZE, KERNEL_SIZE), np.float32)
    lo = (KERNEL_SIZE - MASK_SIZE) // 2
    hi = (KERNEL_SIZE + MASK_SIZE) // 2
    mask[lo:hi, lo:hi] = 0.0
    mask = jnp.asarray(mask)

    w_masked = w_full * mask[None, None, :, :]
    # Pre-transposed ring-only im2col weight: (cout, T*cin), column = tap*cin + c,
    # matching the kernel's sublane stacking order of the patch slabs.
    w_ring_t = jnp.stack([w_masked[:, :, dy, dx] for (dy, dx) in RING_TAPS],
                         axis=1).reshape(cout, len(RING_TAPS) * cin)
    return dict(w_full=w_full, mask=mask, bias=bias,
                w_ring_t_bf16=w_ring_t.astype(jnp.bfloat16),
                bias_col=bias.reshape(cout, 1))


def ref_masked_conv2d(x_nchw, w_full, bias, mask):
    w_m = w_full * mask[None, None, :, :]
    y = jax.lax.conv_general_dilated(
        x_nchw, w_m, window_strides=(1, 1), padding='SAME',
        dimension_numbers=('NCHW', 'OIHW', 'NCHW'),
        precision=jax.lax.Precision.HIGHEST)
    return y + bias.reshape(1, -1, 1, 1)


# --------------------------------------------------------------------------
if __name__ == "__main__":
    B, CIN, H, W = 2, 4, 16, 16
    COUT = 32

    key = jax.random.PRNGKey(0)
    kx, kp = jax.random.split(key)
    x = jax.random.normal(kx, (B, CIN, H, W), jnp.float32)       # NCHW input
    params = make_params(kp, CIN, COUT)

    out = jax.block_until_ready(
        masked_conv2d_pallas(x, params['w_ring_t_bf16'], params['bias_col']))

    assert out.shape == (B, COUT, H, W), out.shape
    assert bool(jnp.all(jnp.isfinite(out)))

    ref = ref_masked_conv2d(x, params['w_full'], params['bias'], params['mask'])
    assert np.allclose(np.asarray(out), np.asarray(ref), atol=3e-2, rtol=3e-2)

    print("KERNEL_OK")
</pallas_src>

<mosaic_0001>
module attributes {stable_mosaic.version = 11 : i64} {
  func.func @kernel(%arg0: i32, %arg1: memref<1x4x420xbf16, #tpu.memory_space<vmem>>, %arg2: memref<32x64xbf16, #tpu.memory_space<vmem>>, %arg3: memref<32x1xf32, #tpu.memory_space<vmem>>, %arg4: memref<1x32x320xf32, #tpu.memory_space<vmem>>) attributes {dimension_semantics = [#tpu.dimension_semantics<parallel>], iteration_bounds = array<i64: 2>, scalar_prefetch = 0 : i64, scratch_operands = 0 : i64, tpu.core_type = #tpu.core_type<tc>, window_params = [{transform_indices = @transform_0, window_bounds = array<i64: 1, 4, 420>}, {pipeline_mode = #tpu.pipeline_mode<synchronous>, transform_indices = @transform_1, window_bounds = array<i64: 32, 64>}, {pipeline_mode = #tpu.pipeline_mode<synchronous>, transform_indices = @transform_2, window_bounds = array<i64: 32, 1>}, {transform_indices = @transform_3, window_bounds = array<i64: 1, 32, 320>}]} {
    %c0 = arith.constant 0 : index
    %c0_0 = arith.constant 0 : index
    %0 = vector.load %arg2[%c0, %c0_0] : memref<32x64xbf16, #tpu.memory_space<vmem>>, vector<32x64xbf16>
    %c0_1 = arith.constant 0 : index
    %c0_2 = arith.constant 0 : index
    %1 = vector.load %arg3[%c0_1, %c0_2] : memref<32x1xf32, #tpu.memory_space<vmem>>, vector<32x1xf32>
    %c0_3 = arith.constant 0 : index
    %c0_4 = arith.constant 0 : index
    %c0_5 = arith.constant 0 : index
    %2 = vector.load %arg1[%c0_3, %c0_4, %c0_5] : memref<1x4x420xbf16, #tpu.memory_space<vmem>>, vector<1x4x420xbf16>
    %3 = vector.shape_cast %2 : vector<1x4x420xbf16> to vector<4x420xbf16>
    %4 = vector.extract_strided_slice %3 {offsets = [0, 0], sizes = [4, 320], strides = [1, 1]} : vector<4x420xbf16> to vector<4x320xbf16>
    %5 = vector.extract_strided_slice %3 {offsets = [0, 1], sizes = [4, 320], strides = [1, 1]} : vector<4x420xbf16> to vector<4x320xbf16>
    %6 = vector.extract_strided_slice %3 {offsets = [0, 2], sizes = [4, 320], strides = [1, 1]} : vector<4x420xbf16> to vector<4x320xbf16>
    %7 = vector.extract_strided_slice %3 {offsets = [0, 3], sizes = [4, 320], strides = [1, 1]} : vector<4x420xbf16> to vector<4x320xbf16>
    %8 = vector.extract_strided_slice %3 {offsets = [0, 4], sizes = [4, 320], strides = [1, 1]} : vector<4x420xbf16> to vector<4x320xbf16>
    %9 = vector.extract_strided_slice %3 {offsets = [0, 20], sizes = [4, 320], strides = [1, 1]} : vector<4x420xbf16> to vector<4x320xbf16>
    %10 = vector.extract_strided_slice %3 {offsets = [0, 24], sizes = [4, 320], strides = [1, 1]} : vector<4x420xbf16> to vector<4x320xbf16>
    %11 = vector.extract_strided_slice %3 {offsets = [0, 40], sizes = [4, 320], strides = [1, 1]} : vector<4x420xbf16> to vector<4x320xbf16>
    %12 = vector.extract_strided_slice %3 {offsets = [0, 44], sizes = [4, 320], strides = [1, 1]} : vector<4x420xbf16> to vector<4x320xbf16>
    %13 = vector.extract_strided_slice %3 {offsets = [0, 60], sizes = [4, 320], strides = [1, 1]} : vector<4x420xbf16> to vector<4x320xbf16>
    %14 = vector.extract_strided_slice %3 {offsets = [0, 64], sizes = [4, 320], strides = [1, 1]} : vector<4x420xbf16> to vector<4x320xbf16>
    %15 = vector.extract_strided_slice %3 {offsets = [0, 80], sizes = [4, 320], strides = [1, 1]} : vector<4x420xbf16> to vector<4x320xbf16>
    %16 = vector.extract_strided_slice %3 {offsets = [0, 81], sizes = [4, 320], strides = [1, 1]} : vector<4x420xbf16> to vector<4x320xbf16>
    %17 = vector.extract_strided_slice %3 {offsets = [0, 82], sizes = [4, 320], strides = [1, 1]} : vector<4x420xbf16> to vector<4x320xbf16>
    %18 = vector.extract_strided_slice %3 {offsets = [0, 83], sizes = [4, 320], strides = [1, 1]} : vector<4x420xbf16> to vector<4x320xbf16>
    %19 = vector.extract_strided_slice %3 {offsets = [0, 84], sizes = [4, 320], strides = [1, 1]} : vector<4x420xbf16> to vector<4x320xbf16>
    %20 = tpu.concatenate %4, %5, %6, %7, %8, %9, %10, %11, %12, %13, %14, %15, %16, %17, %18, %19 in 0 : vector<4x320xbf16>, vector<4x320xbf16>, vector<4x320xbf16>, vector<4x320xbf16>, vector<4x320xbf16>, vector<4x320xbf16>, vector<4x320xbf16>, vector<4x320xbf16>, vector<4x320xbf16>, vector<4x320xbf16>, vector<4x320xbf16>, vector<4x320xbf16>, vector<4x320xbf16>, vector<4x320xbf16>, vector<4x320xbf16>, vector<4x320xbf16> -> vector<64x320xbf16>
    %cst = arith.constant dense<0.000000e+00> : vector<32x320xf32>
    %21 = tpu.matmul %0, %20, %cst {dimension_numbers = #tpu.dot_dimension_numbers<[1], [0], [0], [1], [0, 0, 1, 1], [], []>} : vector<32x64xbf16>, vector<64x320xbf16>, vector<32x320xf32> -> vector<32x320xf32>
    %22 = vector.broadcast %1 : vector<32x1xf32> to vector<32x320xf32>
    %23 = arith.addf %21, %22 : vector<32x320xf32>
    %c0_6 = arith.constant 0 : index
    %c0_7 = arith.constant 0 : index
    %c0_8 = arith.constant 0 : index
    %24 = vector.load %arg4[%c0_6, %c0_7, %c0_8] : memref<1x32x320xf32, #tpu.memory_space<vmem>>, vector<1x32x320xf32>
    %25 = vector.shape_cast %24 : vector<1x32x320xf32> to vector<32x320xf32>
    %26 = vector.shape_cast %23 : vector<32x320xf32> to vector<1x32x320xf32>
    tpu.vector_store %arg4[%c0_6, %c0_7, %c0_8], %26 {strides = array<i32>} : memref<1x32x320xf32, #tpu.memory_space<vmem>>, vector<1x32x320xf32>,
    return
  }
  func.func @transform_0(%arg0: i32) -> (i32, i32, i32) {
    %c0_i32 = arith.constant 0 : i32
    %c0_i32_0 = arith.constant 0 : i32
    %c0_i32_1 = arith.constant 0 : i32
    return %arg0, %c0_i32, %c0_i32_0 : i32, i32, i32
  }
  func.func @transform_1(%arg0: i32) -> (i32, i32) {
    %c0_i32 = arith.constant 0 : i32
    %c0_i32_0 = arith.constant 0 : i32
    %c0_i32_1 = arith.constant 0 : i32
    return %c0_i32, %c0_i32_0 : i32, i32
  }
  func.func @transform_2(%arg0: i32) -> (i32, i32) {
    %c0_i32 = arith.constant 0 : i32
    %c0_i32_0 = arith.constant 0 : i32
    %c0_i32_1 = arith.constant 0 : i32
    return %c0_i32, %c0_i32_0 : i32, i32
  }
  func.func @transform_3(%arg0: i32) -> (i32, i32, i32) {
    %c0_i32 = arith.constant 0 : i32
    %c0_i32_0 = arith.constant 0 : i32
    %c0_i32_1 = arith.constant 0 : i32
    return %arg0, %c0_i32, %c0_i32_0 : i32, i32, i32
  }
}

</mosaic_0001>

<llo_original>
// kernel: masked_conv2d_pallas.1
$region0: #{masked_conv2d_pallas.1}
  #allocation0 [shape = 'u32[]', space=smem, size = 0x4, offset = 0x4, fixed_abs, tag = 'smem constant byte address 0x4 - core index']
  #allocation1 [shape = 'u32[144,128]{1,0:T(1,128)}', space=vmem, size = 0x12000, scoped, tag = 'internal scratch']
  %s0 = inlined_call_operand.vmem [shape: bf16[2,4,420], index: 0, kind: input, shape index: {}]
  %s1 = inlined_call_operand.vmem [shape: bf16[32,64], index: 1, kind: input, shape index: {}]
  %s2 = inlined_call_operand.vmem [shape: f32[32,1], index: 2, kind: input, shape index: {}]
  %s3 = inlined_call_operand.vmem [shape: f32[2,32,320], index: 3, kind: output, shape index: {}]
  %s4 = sld [smem:[#allocation0]]
  $region45: #{masked_conv2d_pallas.1} parent=0
    _
  %s6 = ssub.s32 1, %s4
  %s7 = scalar_select 0, %s6, %s4
  loop: start=0, step=1, limit=4
  $region2: #{masked_conv2d_pallas.1} parent=0 // loop_pre_header
    _
  $region3: #{masked_conv2d_pallas.1} parent=0 // loop_header
    %s9 = sphi 0, %s13
    %p10 = scmp.ge.s32.totalorder %s9, 4
    %s19 = sphi 0, %s21
    %s22 = sphi 0, %s19
    %s23 = sphi 0, %s22
    %s39 = sphi 0, %s23
    %s43 = sphi 0, %s43
    %s45 = sphi 0, %s43
    %s46 = sphi 0, %s45
    %s60 = sphi 0, %s46
    %s64 = sphi 0, %s64
    %s66 = sphi 0, %s64
    %s67 = sphi 0, %s66
    %s81 = sphi 0, %s67
    %s87 = sphi 0, %s89
    %s90 = sphi 0, %s87
    %s91 = sphi 0, %s90
    %s107 = sphi 0, %s91
  $region4: #{masked_conv2d_pallas.1} parent=0 // loop_header_branch
    %12 = sbr.rel (%p10) target = $region8
  $region5: #{masked_conv2d_pallas.1} parent=0 // loop_body
    %s14 = ssub.s32 %s9, 1
    %s15 = ssub.s32 %s9, 2
    %s16 = sadd.s32 %s9, 1
    %s17 = ssub.s32 %s9, %s16
    %p18 = scmp.eq.s32.totalorder %s17, 0
    %s20 = sadd.s32 %s19, 1
    %s21 = scalar_select %p18, %s19, %s20
    %p24 = pneg %p18
    %p25 = scmp.eq.s32.totalorder %s9, 1
    %p26 = por %p24, %p25
    %p27 = scmp.ne.s32.totalorder %s19, %s22
    %p28 = scmp.eq.s32.totalorder %s9, 0
    %p29 = por %p27, %p28
    %p30 = scmp.ne.s32.totalorder %s19, %s22
    %p31 = scmp.eq.s32.totalorder %s14, 1
    %p32 = por %p30, %p31
    %p33 = scmp.ne.s32.totalorder %s22, %s23
    %p34 = scmp.eq.s32.totalorder %s14, 0
    %p35 = por %p33, %p34
    %p36 = scmp.ne.s32.totalorder %s22, %s23
    %p37 = scmp.eq.s32.totalorder %s15, 1
    %p38 = por %p36, %p37
    %p40 = scmp.ne.s32.totalorder %s23, %s39
    %p41 = scmp.eq.s32.totalorder %s15, 0
    %p42 = por %p40, %p41
    %s44 = sadd.s32 %s43, 1
    %p47 = scmp.eq.s32.totalorder %s9, 1
    %p48 = scmp.ne.s32.totalorder %s43, %s45
    %p49 = scmp.eq.s32.totalorder %s9, 0
    %p50 = por %p48, %p49
    %p51 = scmp.ne.s32.totalorder %s43, %s45
    %p52 = scmp.eq.s32.totalorder %s14, 1
    %p53 = por %p51, %p52
    %p54 = scmp.ne.s32.totalorder %s45, %s46
    %p55 = scmp.eq.s32.totalorder %s14, 0
    %p56 = por %p54, %p55
    %p57 = scmp.ne.s32.totalorder %s45, %s46
    %p58 = scmp.eq.s32.totalorder %s15, 1
    %p59 = por %p57, %p58
    %p61 = scmp.ne.s32.totalorder %s46, %s60
    %p62 = scmp.eq.s32.totalorder %s15, 0
    %p63 = por %p61, %p62
    %s65 = sadd.s32 %s64, 1
    %p68 = scmp.eq.s32.totalorder %s9, 1
    %p69 = scmp.ne.s32.totalorder %s64, %s66
    %p70 = scmp.eq.s32.totalorder %s9, 0
    %p71 = por %p69, %p70
    %p72 = scmp.ne.s32.totalorder %s64, %s66
    %p73 = scmp.eq.s32.totalorder %s14, 1
    %p74 = por %p72, %p73
    %p75 = scmp.ne.s32.totalorder %s66, %s67
    %p76 = scmp.eq.s32.totalorder %s14, 0
    %p77 = por %p75, %p76
    %p78 = scmp.ne.s32.totalorder %s66, %s67
    %p79 = scmp.eq.s32.totalorder %s15, 1
    %p80 = por %p78, %p79
    %p82 = scmp.ne.s32.totalorder %s67, %s81
    %p83 = scmp.eq.s32.totalorder %s15, 0
    %p84 = por %p82, %p83
    %s85 = ssub.s32 %s9, %s16
    %p86 = scmp.eq.s32.totalorder %s85, 0
    %s88 = sadd.s32 %s87, 1
    %s89 = scalar_select %p86, %s87, %s88
    %p92 = pneg %p86
    %p93 = scmp.eq.s32.totalorder %s9, 1
    %p94 = por %p92, %p93
    %p95 = scmp.ne.s32.totalorder %s87, %s90
    %p96 = scmp.eq.s32.totalorder %s9, 0
    %p97 = por %p95, %p96
    %p98 = scmp.ne.s32.totalorder %s87, %s90
    %p99 = scmp.eq.s32.totalorder %s14, 1
    %p100 = por %p98, %p99
    %p101 = scmp.ne.s32.totalorder %s90, %s91
    %p102 = scmp.eq.s32.totalorder %s14, 0
    %p103 = por %p101, %p102
    %p104 = scmp.ne.s32.totalorder %s90, %s91
    %p105 = scmp.eq.s32.totalorder %s15, 1
    %p106 = por %p104, %p105
    %p108 = scmp.ne.s32.totalorder %s91, %s107
    %p109 = scmp.eq.s32.totalorder %s15, 0
    %p110 = por %p108, %p109
    %p111 = scmp.le.s32.totalorder 1, %s9
    %p112 = scmp.lt.s32.totalorder %s9, 3
    %p113 = pnand %p111, %p112
    %p114 = pneg %p113
    // Predicated region
    $region9: #{masked_conv2d_pallas.1} parent=5 // pred_check
      _
    $region10: #{masked_conv2d_pallas.1} parent=5 // pred_check_branch
      %116 = sbr.rel (%p113) target = $region12
    $region11: #{masked_conv2d_pallas.1} parent=5 // pred_region
      %s117 = ssub.s32 %s9, 1
      // Predicated region
      $region13: #{masked_conv2d_pallas.1} parent=11 // pred_check
        %p118 = pneg %p56
      $region14: #{masked_conv2d_pallas.1} parent=11 // pred_check_branch
        %120 = sbr.rel (%p118) target = $region16
      $region15: #{masked_conv2d_pallas.1} parent=11 // pred_region
        _
      $region16: #{masked_conv2d_pallas.1} parent=11 // pred_fallthru
        _
      // Predicated region
      $region17: #{masked_conv2d_pallas.1} parent=11 // pred_check
        %p121 = pneg %p77
      $region18: #{masked_conv2d_pallas.1} parent=11 // pred_check_branch
        %123 = sbr.rel (%p121) target = $region20
      $region19: #{masked_conv2d_pallas.1} parent=11 // pred_region
        _
      $region20: #{masked_conv2d_pallas.1} parent=11 // pred_fallthru
        _
    $region12: #{masked_conv2d_pallas.1} parent=5 // pred_fallthru
      _
    %p124 = scmp.lt.s32.totalorder %s9, 2
    // Predicated region
    $region21: #{masked_conv2d_pallas.1} parent=5 // pred_check
      %p125 = pneg %p124
    $region22: #{masked_conv2d_pallas.1} parent=5 // pred_check_branch
      %127 = sbr.rel (%p125) target = $region24
    $region23: #{masked_conv2d_pallas.1} parent=5 // pred_region
      // Predicated region
      $region25: #{masked_conv2d_pallas.1} parent=23 // pred_check
        %p128 = pneg %p29
      $region26: #{masked_conv2d_pallas.1} parent=23 // pred_check_branch
        %130 = sbr.rel (%p128) target = $region28
      $region27: #{masked_conv2d_pallas.1} parent=23 // pred_region
        %p131 = scmp.lt.s32.totalorder %s9, 1
        %s132 = scalar_select %p131, %s9, 1
        %s133 = smul.addr %s132, 4
        %s134 = smul.addr %s133, 2
        %s135 = scalar_lea.vmem %s0, %s134
      $region28: #{masked_conv2d_pallas.1} parent=23 // pred_fallthru
        _
    $region24: #{masked_conv2d_pallas.1} parent=5 // pred_fallthru
      _
    %p136 = scmp.le.s32.totalorder 1, %s9
    %p137 = scmp.lt.s32.totalorder %s9, 3
    %p138 = pnand %p136, %p137
    %p139 = pneg %p138
    // Predicated region
    $region29: #{masked_conv2d_pallas.1} parent=5 // pred_check
      _
    $region30: #{masked_conv2d_pallas.1} parent=5 // pred_check_branch
      %141 = sbr.rel (%p138) target = $region32
    $region31: #{masked_conv2d_pallas.1} parent=5 // pred_region
      %s142 = ssub.s32 %s9, 1
      %p143 = scmp.lt.s32.totalorder %s14, 1
      %s144 = scalar_select %p143, %s14, 1
      %s145 = smul.addr %s144, 4
      %s146 = smul.addr %s145, 2
      %s147 = scalar_lea.vmem %s0, %s146
      %p148 = pneg %p35
      %p149 = pneg %p32
      %p150 = pneg %p56
      %p151 = pneg %p53
      %p152 = pneg %p77
      %p153 = pneg %p74
      %p154 = pneg %p103
      %p155 = pneg %p100
      %p156 = scmp.lt.s32.totalorder %s14, 1
      %s157 = scalar_select %p156, %s14, 1
      %s158 = smul.addr %s157, 12
      %s159 = smul.addr %s158, 8
      %s160 = scalar_lea.vmem %s3, %s159
      %p161 = scmp.lt.s32.totalorder %s14, 1
      %s162 = scalar_select %p161, %s14, 1
      %s163 = smul.addr %s162, 4
      %s164 = smul.addr %s163, 2
      %s165 = scalar_lea.vmem %s0, %s164
      %p166 = scmp.lt.s32.totalorder %s14, 1
      %s167 = scalar_select %p166, %s14, 1
      %s168 = smul.addr %s167, 12
      %s169 = smul.addr %s168, 8
      %s170 = scalar_lea.vmem %s3, %s169
      %v172 = vld [vmem:[%s1] sm:$0xf]
      %v173 = vld [vmem:[%s1 + $0x4] sm:$0xf]
      %v174 = vld [vmem:[%s1 + $0x8] sm:$0xf]
      %v175 = vld [vmem:[%s1 + $0xc] sm:$0xf]
      %v176 = vld [vmem:[%s2] sm:$0xff]
      %v177 = vld [vmem:[%s2 + $0x8] sm:$0xff]
      %v178 = vld [vmem:[%s2 + $0x10] sm:$0xff]
      %v179 = vld [vmem:[%s2 + $0x18] sm:$0xff]
      %v180 = vld [vmem:[%s165] sm:$0xff]
      %v182 = vcombine.high %v180, %v180
      %v184 = vunpack.c.l.s4 1983009808
      %v185 = vunpack.c.0.s8 %v184
      %v186 = vlaneseq
      %v187 = vshrl.u32 %v186, 7
      %v188 = vsub.s32 %v185, %v187
      %v189 = vrot.slane %v180, %v188
      %v191 = vunpack.c.l.s4 1983009808
      %v192 = vunpack.c.0.s8 %v191
      %v193 = vlaneseq
      %v194 = vshrl.u32 %v193, 7
      %v195 = vsub.s32 %v192, %v194
      %v196 = vrot.slane %v182, %v195
      %v197 = vcombine.high %v189, %v189
      %v198 = vcombine.low %v180, %v180
      %v200 = vunpack.c.l.s4 1983009808
      %v201 = vunpack.c.0.s8 %v200
      %v202 = vlaneseq
      %v203 = vshrl.u32 %v202, 7
      %v204 = vsub.s32 %v201, %v203
      %v205 = vrot.slane %v198, %v204
      %v206 = vcombine.high %v205, %v205
      %207 = vrot.lane.b32.xlu0 %v205, 127
      %v208 = vpop.permute.xlu0 %207
      %209 = vrot.lane.b32.xlu0 %v206, 127
      %v210 = vpop.permute.xlu0 %209
      %211 = vrot.lane.b32.xlu0 %v189, 127
      %v212 = vpop.permute.xlu0 %211
      %vm213 = vcmask 1039360
      %v214 = vsel %vm213, %v208, %v210
      %v215 = vsel %vm213, %v210, %v212
      %v216 = vcombine.low %v189, %v189
      %v217 = vcombine.low %v196, %v196
      %218 = vrot.lane.b32.xlu0 %v216, 126
      %v219 = vpop.permute.xlu0 %218
      %220 = vrot.lane.b32.xlu0 %v189, 126
      %v221 = vpop.permute.xlu0 %220
      %222 = vrot.lane.b32.xlu0 %v217, 126
      %v223 = vpop.permute.xlu0 %222
      %vm224 = vcmask 1031168
      %v225 = vsel %vm224, %v219, %v221
      %v226 = vsel %vm224, %v221, %v223
      %v227 = vcombine.low %v205, %v205
      %228 = vrot.lane.b32.xlu0 %v227, 125
      %v229 = vpop.permute.xlu0 %228
      %230 = vrot.lane.b32.xlu0 %v205, 125
      %v231 = vpop.permute.xlu0 %230
      %232 = vrot.lane.b32.xlu0 %v216, 125
      %v233 = vpop.permute.xlu0 %232
      %vm234 = vcmask 1022976
      %v235 = vsel %vm234, %v229, %v231
      %v236 = vsel %vm234, %v231, %v233
      %237 = vrot.lane.b32.xlu0 %v189, 124
      %v238 = vpop.permute.xlu0 %237
      %239 = vrot.lane.b32.xlu0 %v197, 124
      %v240 = vpop.permute.xlu0 %239
      %241 = vrot.lane.b32.xlu0 %v196, 124
      %v242 = vpop.permute.xlu0 %241
      %vm243 = vcmask 1014784
      %v244 = vsel %vm243, %v238, %v240
      %v245 = vsel %vm243, %v240, %v242
      %246 = vrot.lane.b32.xlu0 %v205, 108
      %v247 = vpop.permute.xlu0 %246
      %248 = vrot.lane.b32.xlu0 %v206, 108
      %v249 = vpop.permute.xlu0 %248
      %250 = vrot.lane.b32.xlu0 %v189, 108
      %v251 = vpop.permute.xlu0 %250
      %vm252 = vcmask 883712
      %v253 = vsel %vm252, %v247, %v249
      %v254 = vsel %vm252, %v249, %v251
      %255 = vrot.lane.b32.xlu0 %v216, 104
      %v256 = vpop.permute.xlu0 %255
      %257 = vrot.lane.b32.xlu0 %v189, 104
      %v258 = vpop.permute.xlu0 %257
      %259 = vrot.lane.b32.xlu0 %v217, 104
      %v260 = vpop.permute.xlu0 %259
      %vm261 = vcmask 850944
      %v262 = vsel %vm261, %v256, %v258
      %v263 = vsel %vm261, %v258, %v260
      %264 = vrot.lane.b32.xlu0 %v227, 88
      %v265 = vpop.permute.xlu0 %264
      %266 = vrot.lane.b32.xlu0 %v205, 88
      %v267 = vpop.permute.xlu0 %266
      %268 = vrot.lane.b32.xlu0 %v216, 88
      %v269 = vpop.permute.xlu0 %268
      %vm270 = vcmask 719872
      %v271 = vsel %vm270, %v265, %v267
      %v272 = vsel %vm270, %v267, %v269
      %273 = vrot.lane.b32.xlu0 %v189, 84
      %v274 = vpop.permute.xlu0 %273
      %275 = vrot.lane.b32.xlu0 %v197, 84
      %v276 = vpop.permute.xlu0 %275
      %277 = vrot.lane.b32.xlu0 %v196, 84
      %v278 = vpop.permute.xlu0 %277
      %vm279 = vcmask 687104
      %v280 = vsel %vm279, %v274, %v276
      %v281 = vsel %vm279, %v276, %v278
      %282 = vrot.lane.b32.xlu0 %v205, 68
      %v283 = vpop.permute.xlu0 %282
      %284 = vrot.lane.b32.xlu0 %v206, 68
      %v285 = vpop.permute.xlu0 %284
      %286 = vrot.lane.b32.xlu0 %v189, 68
      %v287 = vpop.permute.xlu0 %286
      %vm288 = vcmask 556032
      %v289 = vsel %vm288, %v283, %v285
      %v290 = vsel %vm288, %v285, %v287
      %291 = vrot.lane.b32.xlu0 %v216, 64
      %v292 = vpop.permute.xlu0 %291
      %293 = vrot.lane.b32.xlu0 %v189, 64
      %v294 = vpop.permute.xlu0 %293
      %295 = vrot.lane.b32.xlu0 %v217, 64
      %v296 = vpop.permute.xlu0 %295
      %vm297 = vcmask 523264
      %v298 = vsel %vm297, %v292, %v294
      %v299 = vsel %vm297, %v294, %v296
      %300 = vrot.lane.b32.xlu0 %v227, 48
      %v301 = vpop.permute.xlu0 %300
      %302 = vrot.lane.b32.xlu0 %v205, 48
      %v303 = vpop.permute.xlu0 %302
      %304 = vrot.lane.b32.xlu0 %v216, 48
      %v305 = vpop.permute.xlu0 %304
      %306 = vrot.lane.b32.xlu0 %v189, 48
      %v307 = vpop.permute.xlu0 %306
      %vm308 = vcmask 392192
      %v309 = vsel %vm308, %v301, %v303
      %v310 = vsel %vm308, %v303, %v305
      %v311 = vsel %vm308, %v305, %v307
      %v312 = vcombine.high %v196, %v196
      %313 = vrot.lane.b32.xlu0 %v189, 47
      %v314 = vpop.permute.xlu0 %313
      %315 = vrot.lane.b32.xlu0 %v197, 47
      %v316 = vpop.permute.xlu0 %315
      %317 = vrot.lane.b32.xlu0 %v196, 47
      %v318 = vpop.permute.xlu0 %317
      %319 = vrot.lane.b32.xlu0 %v312, 47
      %v320 = vpop.permute.xlu0 %319
      %vm321 = vcmask 384000
      %v322 = vsel %vm321, %v314, %v316
      %v323 = vsel %vm321, %v316, %v318
      %v324 = vsel %vm321, %v318, %v320
      %325 = vrot.lane.b32.xlu0 %v205, 46
      %v326 = vpop.permute.xlu0 %325
      %327 = vrot.lane.b32.xlu0 %v206, 46
      %v328 = vpop.permute.xlu0 %327
      %329 = vrot.lane.b32.xlu0 %v189, 46
      %v330 = vpop.permute.xlu0 %329
      %331 = vrot.lane.b32.xlu0 %v197, 46
      %v332 = vpop.permute.xlu0 %331
      %vm333 = vcmask 375808
      %v334 = vsel %vm333, %v326, %v328
      %v335 = vsel %vm333, %v328, %v330
      %v336 = vsel %vm333, %v330, %v332
      %337 = vrot.lane.b32.xlu0 %v216, 45
      %v338 = vpop.permute.xlu0 %337
      %339 = vrot.lane.b32.xlu0 %v189, 45
      %v340 = vpop.permute.xlu0 %339
      %341 = vrot.lane.b32.xlu0 %v217, 45
      %v342 = vpop.permute.xlu0 %341
      %343 = vrot.lane.b32.xlu0 %v196, 45
      %v344 = vpop.permute.xlu0 %343
      %vm345 = vcmask 367616
      %v346 = vsel %vm345, %v338, %v340
      %v347 = vsel %vm345, %v340, %v342
      %v348 = vsel %vm345, %v342, %v344
      %349 = vrot.lane.b32.xlu0 %v227, 44
      %v350 = vpop.permute.xlu0 %349
      %351 = vrot.lane.b32.xlu0 %v205, 44
      %v352 = vpop.permute.xlu0 %351
      %353 = vrot.lane.b32.xlu0 %v216, 44
      %v354 = vpop.permute.xlu0 %353
      %355 = vrot.lane.b32.xlu0 %v189, 44
      %v356 = vpop.permute.xlu0 %355
      %vm357 = vcmask 359424
      %v358 = vsel %vm357, %v350, %v352
      %v359 = vsel %vm357, %v352, %v354
      %v360 = vsel %vm357, %v354, %v356
      %vm361 = vcmask 1041408
      %v364 = vsel %vm361, %v189, %v214
      %v367 = vsel %vm361, %v197, %v215
      %v370 = vsel %vm361, %v196, %v212
      %vm371 = vcmask 1043456
      %v373 = vsel %vm371, %v364, %v225
      %v375 = vsel %vm371, %v367, %v226
      %v377 = vsel %vm371, %v370, %v223
      %vm378 = vcmask 1045504
      %v380 = vsel %vm378, %v373, %v235
      %v383 = vsel %vm378, %v375, %v236
      %v386 = vsel %vm378, %v377, %v233
      %v390 = vsel %vm361, %v244, %v253
      %v393 = vsel %vm361, %v245, %v254
      %v396 = vsel %vm361, %v242, %v251
      %v398 = vsel %vm371, %v390, %v262
      %v400 = vsel %vm371, %v393, %v263
      %v402 = vsel %vm371, %v396, %v260
      %v404 = vsel %vm378, %v398, %v271
      %v407 = vsel %vm378, %v400, %v272
      %v410 = vsel %vm378, %v402, %v269
      %v414 = vsel %vm361, %v280, %v289
      %v417 = vsel %vm361, %v281, %v290
      %v420 = vsel %vm361, %v278, %v287
      %v422 = vsel %vm371, %v414, %v298
      %v424 = vsel %vm371, %v417, %v299
      %v426 = vsel %vm371, %v420, %v296
      %v428 = vsel %vm378, %v422, %v309
      %v431 = vsel %vm378, %v424, %v310
      %v434 = vsel %vm378, %v426, %v311
      %v438 = vsel %vm361, %v322, %v334
      %v441 = vsel %vm361, %v323, %v335
      %v444 = vsel %vm361, %v324, %v336
      %v446 = vsel %vm371, %v438, %v346
      %v448 = vsel %vm371, %v441, %v347
      %v450 = vsel %vm371, %v444, %v348
      %v452 = vsel %vm378, %v446, %v358
      %v455 = vsel %vm378, %v448, %v359
      %v458 = vsel %vm378, %v450, %v360
      %461 = vset.pattern.permute.xlu0 0
      %462 = vperm.xlu0 %461, %v176
      %v463 = vpop.permute.xlu0 %462
      %466 = vset.pattern.permute.xlu0 0
      %467 = vperm.xlu0 %466, %v177
      %v468 = vpop.permute.xlu0 %467
      %471 = vset.pattern.permute.xlu0 0
      %472 = vperm.xlu0 %471, %v178
      %v473 = vpop.permute.xlu0 %472
      %476 = vset.pattern.permute.xlu0 0
      %477 = vperm.xlu0 %476, %v179
      %v478 = vpop.permute.xlu0 %477
      %v484 = vunpack.c.l.b16 %v172
      %v485 = vunpack.c.l.b16 %v173
      %v486 = vunpack.c.l.b16 %v174
      %v487 = vunpack.c.l.b16 %v175
      %v488 = vpack.c.b16 %v485, %v484
      %v489 = vpack.c.b16 %v487, %v486
      %vm490 = vcmask 523264
      %v492 = vsel %vm490, %v488, 0
      %v495 = vsel %vm490, %v489, 0
      %497 = vmatprep.subr.bf16.mxu0 %v383
      %498 = vmatpush1.bf16.msra.mxu0 %v380
      %499 = vmatprep.subr.bf16.mxu0 %v407
      %500 = vmatpush1.bf16.msra.mxu0 %v404
      %501 = vmatprep.subr.bf16.mxu0 %v431
      %502 = vmatpush1.bf16.msra.mxu0 %v428
      %503 = vmatprep.subr.bf16.mxu0 %v455
      %504 = vmatpush1.bf16.msra.mxu0 %v452
      %505 = vmatprep.subr.bf16.mxu0 0
      %506 = vmatpush1.bf16.msra.mxu0 0
      %507 = vmatprep.subr.bf16.mxu0 0
      %508 = vmatpush1.bf16.msra.mxu0 0
      %509 = vmatprep.subr.bf16.mxu0 0
      %510 = vmatpush1.bf16.msra.mxu0 0
      %511 = vmatprep.subr.bf16.mxu0 0
      %512 = vmatpush1.bf16.msra.mxu0 0
      %513 = vmatprep.subr.bf16.mxu0 0
      %514 = vmatpush1.bf16.msra.mxu0 0
      %515 = vmatprep.subr.bf16.mxu0 0
      %516 = vmatpush1.bf16.msra.mxu0 0
      %517 = vmatprep.subr.bf16.mxu0 0
      %518 = vmatpush1.bf16.msra.mxu0 0
      %519 = vmatprep.subr.bf16.mxu0 0
      %520 = vmatpush1.bf16.msra.mxu0 0
      %521 = vmatprep.subr.bf16.mxu0 0
      %522 = vmatpush1.bf16.msra.mxu0 0
      %523 = vmatprep.subr.bf16.mxu0 0
      %524 = vmatpush1.bf16.msra.mxu0 0
      %525 = vmatprep.subr.bf16.mxu0 0
      %526 = vmatpush1.bf16.msra.mxu0 0
      %527 = vmatprep.subr.bf16.mxu0 0
      %528 = vmatpush1.bf16.msra.mxu0 0
      %529 = vmatprep.mubr.bf16.mxu0 0
      %530 = vmatmul.mubr.bf16.gmra.mrb[0].mxu0 %v492
      %v531 = vpop.f32.mrb[0].mxu0
      %v532 = vadd.f32 %v463, %v531
      %v533 = vpop.f32.mrb[0].mxu0
      %v534 = vadd.f32 %v463, %v533
      %v535 = vpop.f32.mrb[0].mxu0
      %v536 = vadd.f32 %v468, %v535
      %v537 = vpop.f32.mrb[0].mxu0
      %v538 = vadd.f32 %v468, %v537
      %539 = vmatprep.mubr.bf16.mxu0 0
      %540 = vmatmul.mubr.bf16.gmra.mrb[0].mxu0 %v495
      %v541 = vpop.f32.mrb[0].mxu0
      %v542 = vadd.f32 %v473, %v541
      %v543 = vpop.f32.mrb[0].mxu0
      %v544 = vadd.f32 %v473, %v543
      %v545 = vpop.f32.mrb[0].mxu0
      %v546 = vadd.f32 %v478, %v545
      %v547 = vpop.f32.mrb[0].mxu0
      %v548 = vadd.f32 %v478, %v547
      %549 = vdwg.mxu0
      %550 = vmatprep.subr.bf16.mxu0 0
      %551 = vmatpush1.bf16.msra.mxu0 %v386
      %552 = vmatprep.subr.bf16.mxu0 0
      %553 = vmatpush1.bf16.msra.mxu0 %v410
      %554 = vmatprep.subr.bf16.mxu0 0
      %555 = vmatpush1.bf16.msra.mxu0 %v434
      %556 = vmatprep.subr.bf16.mxu0 0
      %557 = vmatpush1.bf16.msra.mxu0 %v458
      %558 = vmatprep.subr.bf16.mxu0 0
      %559 = vmatpush1.bf16.msra.mxu0 0
      %560 = vmatprep.subr.bf16.mxu0 0
      %561 = vmatpush1.bf16.msra.mxu0 0
      %562 = vmatprep.subr.bf16.mxu0 0
      %563 = vmatpush1.bf16.msra.mxu0 0
      %564 = vmatprep.subr.bf16.mxu0 0
      %565 = vmatpush1.bf16.msra.mxu0 0
      %566 = vmatprep.subr.bf16.mxu0 0
      %567 = vmatpush1.bf16.msra.mxu0 0
      %568 = vmatprep.subr.bf16.mxu0 0
      %569 = vmatpush1.bf16.msra.mxu0 0
      %570 = vmatprep.subr.bf16.mxu0 0
      %571 = vmatpush1.bf16.msra.mxu0 0
      %572 = vmatprep.subr.bf16.mxu0 0
      %573 = vmatpush1.bf16.msra.mxu0 0
      %574 = vmatprep.subr.bf16.mxu0 0
      %575 = vmatpush1.bf16.msra.mxu0 0
      %576 = vmatprep.subr.bf16.mxu0 0
      %577 = vmatpush1.bf16.msra.mxu0 0
      %578 = vmatprep.subr.bf16.mxu0 0
      %579 = vmatpush1.bf16.msra.mxu0 0
      %580 = vmatprep.subr.bf16.mxu0 0
      %581 = vmatpush1.bf16.msra.mxu0 0
      %582 = vmatprep.mubr.bf16.mxu0 0
      %583 = vmatmul.mubr.bf16.gmra.mrb[0].mxu0 %v492
      %v584 = vpop.f32.mrb[0].mxu0
      %v585 = vadd.f32 %v463, %v584
      %v586 = vpop.f32.mrb[0].mxu0
      %v587 = vpop.f32.mrb[0].mxu0
      %v588 = vadd.f32 %v468, %v587
      %v589 = vpop.f32.mrb[0].mxu0
      %590 = vmatprep.mubr.bf16.mxu0 0
      %591 = vmatmul.mubr.bf16.gmra.mrb[0].mxu0 %v495
      %v592 = vpop.f32.mrb[0].mxu0
      %v593 = vadd.f32 %v473, %v592
      %v594 = vpop.f32.mrb[0].mxu0
      %v595 = vpop.f32.mrb[0].mxu0
      %v596 = vadd.f32 %v478, %v595
      %v597 = vpop.f32.mrb[0].mxu0
      %598 = vdwg.mxu0
      %599 = vst [vmem:[%s170] sm:$0xff] %v532
      %600 = vst [vmem:[%s170 + $0x8] sm:$0xff] %v534
      %601 = vst.msk [vmem:[%s170 + $0x10] sm:$0xff] %vm490, %v585
      %602 = vst [vmem:[%s170 + $0x18] sm:$0xff] %v536
      %603 = vst [vmem:[%s170 + $0x20] sm:$0xff] %v538
      %604 = vst.msk [vmem:[%s170 + $0x28] sm:$0xff] %vm490, %v588
      %605 = vst [vmem:[%s170 + $0x30] sm:$0xff] %v542
      %606 = vst [vmem:[%s170 + $0x38] sm:$0xff] %v544
      %607 = vst.msk [vmem:[%s170 + $0x40] sm:$0xff] %vm490, %v593
      %608 = vst [vmem:[%s170 + $0x48] sm:$0xff] %v546
      %609 = vst [vmem:[%s170 + $0x50] sm:$0xff] %v548
      %610 = vst.msk [vmem:[%s170 + $0x58] sm:$0xff] %vm490, %v596
      %p611 = scmp.lt.s32.totalorder %s14, 1
      %s612 = scalar_select %p611, %s14, 1
      %s613 = smul.addr %s612, 12
      %s614 = smul.addr %s613, 8
      %s615 = scalar_lea.vmem %s3, %s614
      // Predicated region
      $region33: #{masked_conv2d_pallas.1} parent=31 // pred_check
        %p616 = pneg %p100
      $region34: #{masked_conv2d_pallas.1} parent=31 // pred_check_branch
        %618 = sbr.rel (%p616) target = $region36
      $region35: #{masked_conv2d_pallas.1} parent=31 // pred_region
        _
      $region36: #{masked_conv2d_pallas.1} parent=31 // pred_fallthru
        _
    $region32: #{masked_conv2d_pallas.1} parent=5 // pred_fallthru
      _
    %p619 = scmp.le.s32.totalorder 2, %s9
    // Predicated region
    $region37: #{masked_conv2d_pallas.1} parent=5 // pred_check
      %p620 = pneg %p619
    $region38: #{masked_conv2d_pallas.1} parent=5 // pred_check_branch
      %622 = sbr.rel (%p620) target = $region40
    $region39: #{masked_conv2d_pallas.1} parent=5 // pred_region
      %s623 = ssub.s32 %s9, 2
      // Predicated region
      $region41: #{masked_conv2d_pallas.1} parent=39 // pred_check
        %p624 = pneg %p106
      $region42: #{masked_conv2d_pallas.1} parent=39 // pred_check_branch
        %626 = sbr.rel (%p624) target = $region44
      $region43: #{masked_conv2d_pallas.1} parent=39 // pred_region
        %p627 = scmp.lt.s32.totalorder %s15, 1
        %s628 = scalar_select %p627, %s15, 1
        %s629 = smul.addr %s628, 12
        %s630 = smul.addr %s629, 8
        %s631 = scalar_lea.vmem %s3, %s630
      $region44: #{masked_conv2d_pallas.1} parent=39 // pred_fallthru
        _
    $region40: #{masked_conv2d_pallas.1} parent=5 // pred_fallthru
      _
  $region6: #{masked_conv2d_pallas.1} parent=0 // loop_footer
    %s13 = sadd.s32 1, %s9
  $region7: #{masked_conv2d_pallas.1} parent=0 // loop_footer_branch
    %8 = sbr.rel target = $region3
  $region8: #{masked_conv2d_pallas.1} parent=0 // loop_exit
    _

</llo_original>
